<compile_context>
chip_gen: v7x
topology: tpu7x:2x2x1
jax: 0.10.0
libtpu: 0.0.40
codegen_flags: <defaults>
</compile_context>

<pallas_src>
import jax
import jax.numpy as jnp
from jax.experimental import pallas as pl
from jax.experimental.pallas import tpu as pltpu

BN_EPS = 1e-5


# ----------------------------------------------------------------------------
# Fused kernel: one (N, PADW) batch per grid step, everything resident in VMEM.
# ----------------------------------------------------------------------------
def _make_fused_kernel(D, PADW):
    def kernel(x_ref, wpack_ref, vec_ref, o_ref):
        # x_ref:     (N, PADW)       current batch, zero-padded lanes >= D
        # wpack_ref: (6, PADW, PADW) zero-padded (din, dout) weight blocks
        # vec_ref:   (11, PADW)      rows 2i / 2i+1 = gamma_i / beta_i (i<5),
        #                            row 10 = final decoder bias
        # o_ref:     (N, D)
        vec = vec_ref[...]                    # one small load, rows sliced below
        h = x_ref[...]                        # activations live in vregs

        for li in range(5):                   # five Linear -> BN -> ReLU stages
            gamma = vec[2 * li:2 * li + 1, :]          # (1, PADW), lane-0 aligned
            beta = vec[2 * li + 1:2 * li + 2, :]       # (1, PADW)

            # Linear (bias omitted: exactly cancelled by BN mean subtraction).
            y = jnp.dot(h, wpack_ref[li],
                        preferred_element_type=jnp.float32)      # MXU

            # BatchNorm1d (training): one-pass batch stats, biased variance.
            mean = jnp.mean(y, axis=0, keepdims=True)            # (1, PADW)
            msq = jnp.mean(y * y, axis=0, keepdims=True)         # independent
            var = msq - mean * mean

            # Folded affine + ReLU: one FMA + max per element.
            scale = gamma * jax.lax.rsqrt(var + BN_EPS)          # EUP rsqrt
            shift = beta - mean * scale
            h = jnp.maximum(y * scale + shift, 0.0)
            # Padded lanes: mean = var = 0, gamma = beta = 0 -> h stays 0.

        # Final decoder Linear (no BN / ReLU): bias is real here.
        bias = vec[10:11, :]                                     # (1, PADW)
        y = jnp.dot(h, wpack_ref[5], preferred_element_type=jnp.float32) + bias
        o_ref[...] = y[:, :D]

    return kernel


def make_forward(wpack, vec, D, N, G, PADW):
    """Jitted forward over G stacked batches: one pallas_call, grid=(G,)."""
    kernel = _make_fused_kernel(D, PADW)
    fused = pl.pallas_call(
        kernel,
        out_shape=jax.ShapeDtypeStruct((G, N, D), jnp.float32),
        grid=(G,),
        in_specs=[
            # Per-batch activations: new block each grid step.
            pl.BlockSpec((None, N, PADW), lambda g: (g, 0, 0)),
            # Weight pack + vector pack: constant block index -> DMA'd once,
            # VMEM-resident for the whole grid.
            pl.BlockSpec((6, PADW, PADW), lambda g: (0, 0, 0)),
            pl.BlockSpec((11, PADW), lambda g: (0, 0)),
        ],
        out_specs=pl.BlockSpec((None, N, D), lambda g: (g, 0, 0)),
        compiler_params=pltpu.CompilerParams(
            dimension_semantics=("parallel",)),   # v7x: shard batches over 2 TCs
    )

    @jax.jit
    def fwd(x):                                   # x: (G, N, D)
        if D < PADW:
            x = jnp.pad(x, ((0, 0), (0, 0), (0, PADW - D)))
        return fused(x, wpack, vec)

    return fwd


# ----------------------------------------------------------------------------
# Parameter construction (deterministic, synthetic) + packing
# ----------------------------------------------------------------------------
def init_layers(key, D, H, B):
    """Per-layer params: weight stored (in, out), bias, BN gamma/beta."""
    dims = [
        (D, H), (H, H), (H, B),      # encoder linears
        (B, H), (H, H), (H, D),      # decoder linears
    ]
    layers = []
    for i, (din, dout) in enumerate(dims):
        key, kw, kb, kg, kbt = jax.random.split(key, 5)
        w = (jax.random.normal(kw, (din, dout), jnp.float32)
             * (1.0 / jnp.sqrt(din)))
        b = jax.random.normal(kb, (1, dout), jnp.float32) * 0.01
        has_bn = i != 5
        if has_bn:
            gamma = 1.0 + 0.1 * jax.random.normal(kg, (1, dout), jnp.float32)
            beta = 0.1 * jax.random.normal(kbt, (1, dout), jnp.float32)
        else:
            gamma = beta = None
        layers.append((w, b, gamma, beta, has_bn))
    return layers


def pack_params(layers, D, PADW):
    """Pack 6 weights into one (6,PADW,PADW) slab and the 11 vectors row-wise."""
    wpack = jnp.zeros((6, PADW, PADW), jnp.float32)
    for i, (w, _, _, _, _) in enumerate(layers):
        din, dout = w.shape
        wpack = wpack.at[i, :din, :dout].set(w)

    vec = jnp.zeros((11, PADW), jnp.float32)
    for i in range(5):
        w, _, gamma, beta, _ = layers[i]
        dout = w.shape[1]
        vec = vec.at[2 * i, :dout].set(gamma[0])
        vec = vec.at[2 * i + 1, :dout].set(beta[0])
    vec = vec.at[10, :D].set(layers[5][1][0])       # final decoder bias
    return wpack, vec


def reference_forward(x, layers):
    """Pure-JAX reference matching the PyTorch training-mode forward."""
    h = x
    for (w, b, gamma, beta, has_bn) in layers:
        y = h @ w + b
        if has_bn:
            mean = jnp.mean(y, axis=0, keepdims=True)
            var = jnp.mean((y - mean) ** 2, axis=0, keepdims=True)
            y = gamma * (y - mean) / jnp.sqrt(var + BN_EPS) + beta
            y = jnp.maximum(y, 0.0)
        h = y
    return h


# ----------------------------------------------------------------------------
if __name__ == "__main__":
    G, N, D, H, B = 4, 8, 32, 16, 4     # stacked batches, batch, in, hidden, bottleneck
    PADW = max(D, H, B)                  # common padded feature width (lanes)

    key = jax.random.PRNGKey(0)
    key, kx = jax.random.split(key)
    x = jax.random.normal(kx, (G, N, D), jnp.float32)

    layers = init_layers(key, D, H, B)
    wpack, vec = pack_params(layers, D, PADW)
    forward = make_forward(wpack, vec, D, N, G, PADW)

    out = forward(x)
    jax.block_until_ready(out)

    ref = jnp.stack([reference_forward(x[g], layers) for g in range(G)])
    assert out.shape == (G, N, D), out.shape
    assert jnp.allclose(out, ref, atol=2e-4, rtol=2e-4), "mismatch vs reference"

    print("KERNEL_OK")
</pallas_src>

<mosaic_0001>
module attributes {stable_mosaic.version = 11 : i64} {
  func.func @kernel(%arg0: i32, %arg1: memref<1x8x32xf32, #tpu.memory_space<vmem>>, %arg2: memref<6x32x32xf32, #tpu.memory_space<vmem>>, %arg3: memref<11x32xf32, #tpu.memory_space<vmem>>, %arg4: memref<1x8x32xf32, #tpu.memory_space<vmem>>) attributes {dimension_semantics = [#tpu.dimension_semantics<parallel>], iteration_bounds = array<i64: 4>, scalar_prefetch = 0 : i64, scratch_operands = 0 : i64, tpu.core_type = #tpu.core_type<tc>, window_params = [{transform_indices = @transform_0, window_bounds = array<i64: 1, 8, 32>}, {pipeline_mode = #tpu.pipeline_mode<synchronous>, transform_indices = @transform_1, window_bounds = array<i64: 6, 32, 32>}, {pipeline_mode = #tpu.pipeline_mode<synchronous>, transform_indices = @transform_2, window_bounds = array<i64: 11, 32>}, {transform_indices = @transform_3, window_bounds = array<i64: 1, 8, 32>}]} {
    %c0 = arith.constant 0 : index
    %c0_0 = arith.constant 0 : index
    %0 = vector.load %arg3[%c0, %c0_0] : memref<11x32xf32, #tpu.memory_space<vmem>>, vector<11x32xf32>
    %c0_1 = arith.constant 0 : index
    %c0_2 = arith.constant 0 : index
    %c0_3 = arith.constant 0 : index
    %1 = vector.load %arg1[%c0_1, %c0_2, %c0_3] : memref<1x8x32xf32, #tpu.memory_space<vmem>>, vector<1x8x32xf32>
    %2 = vector.shape_cast %1 : vector<1x8x32xf32> to vector<8x32xf32>
    %3 = vector.extract_strided_slice %0 {offsets = [0, 0], sizes = [1, 32], strides = [1, 1]} : vector<11x32xf32> to vector<1x32xf32>
    %4 = vector.extract_strided_slice %0 {offsets = [1, 0], sizes = [1, 32], strides = [1, 1]} : vector<11x32xf32> to vector<1x32xf32>
    %c0_4 = arith.constant 0 : index
    %c0_5 = arith.constant 0 : index
    %c0_6 = arith.constant 0 : index
    %5 = vector.load %arg2[%c0_4, %c0_5, %c0_6] : memref<6x32x32xf32, #tpu.memory_space<vmem>>, vector<1x32x32xf32>
    %6 = vector.shape_cast %5 : vector<1x32x32xf32> to vector<32x32xf32>
    %cst = arith.constant dense<0.000000e+00> : vector<8x32xf32>
    %7 = tpu.matmul %2, %6, %cst {dimension_numbers = #tpu.dot_dimension_numbers<[1], [0], [0], [1], [0, 0, 1, 1], [], []>} : vector<8x32xf32>, vector<32x32xf32>, vector<8x32xf32> -> vector<8x32xf32>
    %cst_7 = arith.constant dense<0.000000e+00> : vector<32xf32>
    %8 = vector.multi_reduction <add>, %7, %cst_7 [0] : vector<8x32xf32> to vector<32xf32>
    %9 = vector.shape_cast %8 : vector<32xf32> to vector<1x32xf32>
    %cst_8 = arith.constant 8.000000e+00 : f32
    %10 = vector.broadcast %cst_8 : f32 to vector<1x32xf32>
    %11 = arith.divf %9, %10 : vector<1x32xf32>
    %12 = arith.mulf %7, %7 : vector<8x32xf32>
    %cst_9 = arith.constant dense<0.000000e+00> : vector<32xf32>
    %13 = vector.multi_reduction <add>, %12, %cst_9 [0] : vector<8x32xf32> to vector<32xf32>
    %14 = vector.shape_cast %13 : vector<32xf32> to vector<1x32xf32>
    %cst_10 = arith.constant 8.000000e+00 : f32
    %15 = vector.broadcast %cst_10 : f32 to vector<1x32xf32>
    %16 = arith.divf %14, %15 : vector<1x32xf32>
    %17 = arith.mulf %11, %11 : vector<1x32xf32>
    %18 = arith.subf %16, %17 : vector<1x32xf32>
    %cst_11 = arith.constant 9.99999974E-6 : f32
    %19 = vector.broadcast %cst_11 : f32 to vector<1x32xf32>
    %20 = arith.addf %18, %19 : vector<1x32xf32>
    %21 = math.rsqrt %20 : vector<1x32xf32>
    %22 = arith.mulf %3, %21 : vector<1x32xf32>
    %23 = arith.mulf %11, %22 : vector<1x32xf32>
    %24 = arith.subf %4, %23 : vector<1x32xf32>
    %25 = vector.broadcast %22 : vector<1x32xf32> to vector<8x32xf32>
    %26 = arith.mulf %7, %25 : vector<8x32xf32>
    %27 = vector.broadcast %24 : vector<1x32xf32> to vector<8x32xf32>
    %28 = arith.addf %26, %27 : vector<8x32xf32>
    %cst_12 = arith.constant 0.000000e+00 : f32
    %29 = vector.broadcast %cst_12 : f32 to vector<8x32xf32>
    %30 = arith.maximumf %28, %29 : vector<8x32xf32>
    %31 = vector.extract_strided_slice %0 {offsets = [2, 0], sizes = [1, 32], strides = [1, 1]} : vector<11x32xf32> to vector<1x32xf32>
    %32 = vector.extract_strided_slice %0 {offsets = [3, 0], sizes = [1, 32], strides = [1, 1]} : vector<11x32xf32> to vector<1x32xf32>
    %c1 = arith.constant 1 : index
    %c0_13 = arith.constant 0 : index
    %c0_14 = arith.constant 0 : index
    %33 = vector.load %arg2[%c1, %c0_13, %c0_14] : memref<6x32x32xf32, #tpu.memory_space<vmem>>, vector<1x32x32xf32>
    %34 = vector.shape_cast %33 : vector<1x32x32xf32> to vector<32x32xf32>
    %cst_15 = arith.constant dense<0.000000e+00> : vector<8x32xf32>
    %35 = tpu.matmul %30, %34, %cst_15 {dimension_numbers = #tpu.dot_dimension_numbers<[1], [0], [0], [1], [0, 0, 1, 1], [], []>} : vector<8x32xf32>, vector<32x32xf32>, vector<8x32xf32> -> vector<8x32xf32>
    %cst_16 = arith.constant dense<0.000000e+00> : vector<32xf32>
    %36 = vector.multi_reduction <add>, %35, %cst_16 [0] : vector<8x32xf32> to vector<32xf32>
    %37 = vector.shape_cast %36 : vector<32xf32> to vector<1x32xf32>
    %cst_17 = arith.constant 8.000000e+00 : f32
    %38 = vector.broadcast %cst_17 : f32 to vector<1x32xf32>
    %39 = arith.divf %37, %38 : vector<1x32xf32>
    %40 = arith.mulf %35, %35 : vector<8x32xf32>
    %cst_18 = arith.constant dense<0.000000e+00> : vector<32xf32>
    %41 = vector.multi_reduction <add>, %40, %cst_18 [0] : vector<8x32xf32> to vector<32xf32>
    %42 = vector.shape_cast %41 : vector<32xf32> to vector<1x32xf32>
    %cst_19 = arith.constant 8.000000e+00 : f32
    %43 = vector.broadcast %cst_19 : f32 to vector<1x32xf32>
    %44 = arith.divf %42, %43 : vector<1x32xf32>
    %45 = arith.mulf %39, %39 : vector<1x32xf32>
    %46 = arith.subf %44, %45 : vector<1x32xf32>
    %cst_20 = arith.constant 9.99999974E-6 : f32
    %47 = vector.broadcast %cst_20 : f32 to vector<1x32xf32>
    %48 = arith.addf %46, %47 : vector<1x32xf32>
    %49 = math.rsqrt %48 : vector<1x32xf32>
    %50 = arith.mulf %31, %49 : vector<1x32xf32>
    %51 = arith.mulf %39, %50 : vector<1x32xf32>
    %52 = arith.subf %32, %51 : vector<1x32xf32>
    %53 = vector.broadcast %50 : vector<1x32xf32> to vector<8x32xf32>
    %54 = arith.mulf %35, %53 : vector<8x32xf32>
    %55 = vector.broadcast %52 : vector<1x32xf32> to vector<8x32xf32>
    %56 = arith.addf %54, %55 : vector<8x32xf32>
    %cst_21 = arith.constant 0.000000e+00 : f32
    %57 = vector.broadcast %cst_21 : f32 to vector<8x32xf32>
    %58 = arith.maximumf %56, %57 : vector<8x32xf32>
    %59 = vector.extract_strided_slice %0 {offsets = [4, 0], sizes = [1, 32], strides = [1, 1]} : vector<11x32xf32> to vector<1x32xf32>
    %60 = vector.extract_strided_slice %0 {offsets = [5, 0], sizes = [1, 32], strides = [1, 1]} : vector<11x32xf32> to vector<1x32xf32>
    %c2 = arith.constant 2 : index
    %c0_22 = arith.constant 0 : index
    %c0_23 = arith.constant 0 : index
    %61 = vector.load %arg2[%c2, %c0_22, %c0_23] : memref<6x32x32xf32, #tpu.memory_space<vmem>>, vector<1x32x32xf32>
    %62 = vector.shape_cast %61 : vector<1x32x32xf32> to vector<32x32xf32>
    %cst_24 = arith.constant dense<0.000000e+00> : vector<8x32xf32>
    %63 = tpu.matmul %58, %62, %cst_24 {dimension_numbers = #tpu.dot_dimension_numbers<[1], [0], [0], [1], [0, 0, 1, 1], [], []>} : vector<8x32xf32>, vector<32x32xf32>, vector<8x32xf32> -> vector<8x32xf32>
    %cst_25 = arith.constant dense<0.000000e+00> : vector<32xf32>
    %64 = vector.multi_reduction <add>, %63, %cst_25 [0] : vector<8x32xf32> to vector<32xf32>
    %65 = vector.shape_cast %64 : vector<32xf32> to vector<1x32xf32>
    %cst_26 = arith.constant 8.000000e+00 : f32
    %66 = vector.broadcast %cst_26 : f32 to vector<1x32xf32>
    %67 = arith.divf %65, %66 : vector<1x32xf32>
    %68 = arith.mulf %63, %63 : vector<8x32xf32>
    %cst_27 = arith.constant dense<0.000000e+00> : vector<32xf32>
    %69 = vector.multi_reduction <add>, %68, %cst_27 [0] : vector<8x32xf32> to vector<32xf32>
    %70 = vector.shape_cast %69 : vector<32xf32> to vector<1x32xf32>
    %cst_28 = arith.constant 8.000000e+00 : f32
    %71 = vector.broadcast %cst_28 : f32 to vector<1x32xf32>
    %72 = arith.divf %70, %71 : vector<1x32xf32>
    %73 = arith.mulf %67, %67 : vector<1x32xf32>
    %74 = arith.subf %72, %73 : vector<1x32xf32>
    %cst_29 = arith.constant 9.99999974E-6 : f32
    %75 = vector.broadcast %cst_29 : f32 to vector<1x32xf32>
    %76 = arith.addf %74, %75 : vector<1x32xf32>
    %77 = math.rsqrt %76 : vector<1x32xf32>
    %78 = arith.mulf %59, %77 : vector<1x32xf32>
    %79 = arith.mulf %67, %78 : vector<1x32xf32>
    %80 = arith.subf %60, %79 : vector<1x32xf32>
    %81 = vector.broadcast %78 : vector<1x32xf32> to vector<8x32xf32>
    %82 = arith.mulf %63, %81 : vector<8x32xf32>
    %83 = vector.broadcast %80 : vector<1x32xf32> to vector<8x32xf32>
    %84 = arith.addf %82, %83 : vector<8x32xf32>
    %cst_30 = arith.constant 0.000000e+00 : f32
    %85 = vector.broadcast %cst_30 : f32 to vector<8x32xf32>
    %86 = arith.maximumf %84, %85 : vector<8x32xf32>
    %87 = vector.extract_strided_slice %0 {offsets = [6, 0], sizes = [1, 32], strides = [1, 1]} : vector<11x32xf32> to vector<1x32xf32>
    %88 = vector.extract_strided_slice %0 {offsets = [7, 0], sizes = [1, 32], strides = [1, 1]} : vector<11x32xf32> to vector<1x32xf32>
    %c3 = arith.constant 3 : index
    %c0_31 = arith.constant 0 : index
    %c0_32 = arith.constant 0 : index
    %89 = vector.load %arg2[%c3, %c0_31, %c0_32] : memref<6x32x32xf32, #tpu.memory_space<vmem>>, vector<1x32x32xf32>
    %90 = vector.shape_cast %89 : vector<1x32x32xf32> to vector<32x32xf32>
    %cst_33 = arith.constant dense<0.000000e+00> : vector<8x32xf32>
    %91 = tpu.matmul %86, %90, %cst_33 {dimension_numbers = #tpu.dot_dimension_numbers<[1], [0], [0], [1], [0, 0, 1, 1], [], []>} : vector<8x32xf32>, vector<32x32xf32>, vector<8x32xf32> -> vector<8x32xf32>
    %cst_34 = arith.constant dense<0.000000e+00> : vector<32xf32>
    %92 = vector.multi_reduction <add>, %91, %cst_34 [0] : vector<8x32xf32> to vector<32xf32>
    %93 = vector.shape_cast %92 : vector<32xf32> to vector<1x32xf32>
    %cst_35 = arith.constant 8.000000e+00 : f32
    %94 = vector.broadcast %cst_35 : f32 to vector<1x32xf32>
    %95 = arith.divf %93, %94 : vector<1x32xf32>
    %96 = arith.mulf %91, %91 : vector<8x32xf32>
    %cst_36 = arith.constant dense<0.000000e+00> : vector<32xf32>
    %97 = vector.multi_reduction <add>, %96, %cst_36 [0] : vector<8x32xf32> to vector<32xf32>
    %98 = vector.shape_cast %97 : vector<32xf32> to vector<1x32xf32>
    %cst_37 = arith.constant 8.000000e+00 : f32
    %99 = vector.broadcast %cst_37 : f32 to vector<1x32xf32>
    %100 = arith.divf %98, %99 : vector<1x32xf32>
    %101 = arith.mulf %95, %95 : vector<1x32xf32>
    %102 = arith.subf %100, %101 : vector<1x32xf32>
    %cst_38 = arith.constant 9.99999974E-6 : f32
    %103 = vector.broadcast %cst_38 : f32 to vector<1x32xf32>
    %104 = arith.addf %102, %103 : vector<1x32xf32>
    %105 = math.rsqrt %104 : vector<1x32xf32>
    %106 = arith.mulf %87, %105 : vector<1x32xf32>
    %107 = arith.mulf %95, %106 : vector<1x32xf32>
    %108 = arith.subf %88, %107 : vector<1x32xf32>
    %109 = vector.broadcast %106 : vector<1x32xf32> to vector<8x32xf32>
    %110 = arith.mulf %91, %109 : vector<8x32xf32>
    %111 = vector.broadcast %108 : vector<1x32xf32> to vector<8x32xf32>
    %112 = arith.addf %110, %111 : vector<8x32xf32>
    %cst_39 = arith.constant 0.000000e+00 : f32
    %113 = vector.broadcast %cst_39 : f32 to vector<8x32xf32>
    %114 = arith.maximumf %112, %113 : vector<8x32xf32>
    %115 = vector.extract_strided_slice %0 {offsets = [8, 0], sizes = [1, 32], strides = [1, 1]} : vector<11x32xf32> to vector<1x32xf32>
    %116 = vector.extract_strided_slice %0 {offsets = [9, 0], sizes = [1, 32], strides = [1, 1]} : vector<11x32xf32> to vector<1x32xf32>
    %c4 = arith.constant 4 : index
    %c0_40 = arith.constant 0 : index
    %c0_41 = arith.constant 0 : index
    %117 = vector.load %arg2[%c4, %c0_40, %c0_41] : memref<6x32x32xf32, #tpu.memory_space<vmem>>, vector<1x32x32xf32>
    %118 = vector.shape_cast %117 : vector<1x32x32xf32> to vector<32x32xf32>
    %cst_42 = arith.constant dense<0.000000e+00> : vector<8x32xf32>
    %119 = tpu.matmul %114, %118, %cst_42 {dimension_numbers = #tpu.dot_dimension_numbers<[1], [0], [0], [1], [0, 0, 1, 1], [], []>} : vector<8x32xf32>, vector<32x32xf32>, vector<8x32xf32> -> vector<8x32xf32>
    %cst_43 = arith.constant dense<0.000000e+00> : vector<32xf32>
    %120 = vector.multi_reduction <add>, %119, %cst_43 [0] : vector<8x32xf32> to vector<32xf32>
    %121 = vector.shape_cast %120 : vector<32xf32> to vector<1x32xf32>
    %cst_44 = arith.constant 8.000000e+00 : f32
    %122 = vector.broadcast %cst_44 : f32 to vector<1x32xf32>
    %123 = arith.divf %121, %122 : vector<1x32xf32>
    %124 = arith.mulf %119, %119 : vector<8x32xf32>
    %cst_45 = arith.constant dense<0.000000e+00> : vector<32xf32>
    %125 = vector.multi_reduction <add>, %124, %cst_45 [0] : vector<8x32xf32> to vector<32xf32>
    %126 = vector.shape_cast %125 : vector<32xf32> to vector<1x32xf32>
    %cst_46 = arith.constant 8.000000e+00 : f32
    %127 = vector.broadcast %cst_46 : f32 to vector<1x32xf32>
    %128 = arith.divf %126, %127 : vector<1x32xf32>
    %129 = arith.mulf %123, %123 : vector<1x32xf32>
    %130 = arith.subf %128, %129 : vector<1x32xf32>
    %cst_47 = arith.constant 9.99999974E-6 : f32
    %131 = vector.broadcast %cst_47 : f32 to vector<1x32xf32>
    %132 = arith.addf %130, %131 : vector<1x32xf32>
    %133 = math.rsqrt %132 : vector<1x32xf32>
    %134 = arith.mulf %115, %133 : vector<1x32xf32>
    %135 = arith.mulf %123, %134 : vector<1x32xf32>
    %136 = arith.subf %116, %135 : vector<1x32xf32>
    %137 = vector.broadcast %134 : vector<1x32xf32> to vector<8x32xf32>
    %138 = arith.mulf %119, %137 : vector<8x32xf32>
    %139 = vector.broadcast %136 : vector<1x32xf32> to vector<8x32xf32>
    %140 = arith.addf %138, %139 : vector<8x32xf32>
    %cst_48 = arith.constant 0.000000e+00 : f32
    %141 = vector.broadcast %cst_48 : f32 to vector<8x32xf32>
    %142 = arith.maximumf %140, %141 : vector<8x32xf32>
    %143 = vector.extract_strided_slice %0 {offsets = [10, 0], sizes = [1, 32], strides = [1, 1]} : vector<11x32xf32> to vector<1x32xf32>
    %c5 = arith.constant 5 : index
    %c0_49 = arith.constant 0 : index
    %c0_50 = arith.constant 0 : index
    %144 = vector.load %arg2[%c5, %c0_49, %c0_50] : memref<6x32x32xf32, #tpu.memory_space<vmem>>, vector<1x32x32xf32>
    %145 = vector.shape_cast %144 : vector<1x32x32xf32> to vector<32x32xf32>
    %cst_51 = arith.constant dense<0.000000e+00> : vector<8x32xf32>
    %146 = tpu.matmul %142, %145, %cst_51 {dimension_numbers = #tpu.dot_dimension_numbers<[1], [0], [0], [1], [0, 0, 1, 1], [], []>} : vector<8x32xf32>, vector<32x32xf32>, vector<8x32xf32> -> vector<8x32xf32>
    %147 = vector.broadcast %143 : vector<1x32xf32> to vector<8x32xf32>
    %148 = arith.addf %146, %147 : vector<8x32xf32>
    %c0_52 = arith.constant 0 : index
    %c0_53 = arith.constant 0 : index
    %c0_54 = arith.constant 0 : index
    %149 = vector.load %arg4[%c0_52, %c0_53, %c0_54] : memref<1x8x32xf32, #tpu.memory_space<vmem>>, vector<1x8x32xf32>
    %150 = vector.shape_cast %149 : vector<1x8x32xf32> to vector<8x32xf32>
    %151 = vector.shape_cast %148 : vector<8x32xf32> to vector<1x8x32xf32>
    tpu.vector_store %arg4[%c0_52, %c0_53, %c0_54], %151 {strides = array<i32>} : memref<1x8x32xf32, #tpu.memory_space<vmem>>, vector<1x8x32xf32>,
    return
  }
  func.func @transform_0(%arg0: i32) -> (i32, i32, i32) {
    %c0_i32 = arith.constant 0 : i32
    %c0_i32_0 = arith.constant 0 : i32
    %c0_i32_1 = arith.constant 0 : i32
    return %arg0, %c0_i32, %c0_i32_0 : i32, i32, i32
  }
  func.func @transform_1(%arg0: i32) -> (i32, i32, i32) {
    %c0_i32 = arith.constant 0 : i32
    %c0_i32_0 = arith.constant 0 : i32
    %c0_i32_1 = arith.constant 0 : i32
    %c0_i32_2 = arith.constant 0 : i32
    return %c0_i32, %c0_i32_0, %c0_i32_1 : i32, i32, i32
  }
  func.func @transform_2(%arg0: i32) -> (i32, i32) {
    %c0_i32 = arith.constant 0 : i32
    %c0_i32_0 = arith.constant 0 : i32
    %c0_i32_1 = arith.constant 0 : i32
    return %c0_i32, %c0_i32_0 : i32, i32
  }
  func.func @transform_3(%arg0: i32) -> (i32, i32, i32) {
    %c0_i32 = arith.constant 0 : i32
    %c0_i32_0 = arith.constant 0 : i32
    %c0_i32_1 = arith.constant 0 : i32
    return %arg0, %c0_i32, %c0_i32_0 : i32, i32, i32
  }
}

</mosaic_0001>

<llo_original>
// kernel: fwd.1
$region0: #{fwd.1}
  #allocation0 [shape = 'u32[]', space=smem, size = 0x4, offset = 0x4, fixed_abs, tag = 'smem constant byte address 0x4 - core index']
  #allocation1 [shape = 'u32[144,128]{1,0:T(1,128)}', space=vmem, size = 0x12000, scoped, tag = 'internal scratch']
  %s0 = inlined_call_operand.hbm [shape: f32[4,8,32], index: 0, kind: input, shape index: {}]
  %s1 = inlined_call_operand.hbm [shape: f32[6,32,32], index: 1, kind: input, shape index: {}]
  %s2 = inlined_call_operand.hbm [shape: f32[11,32], index: 2, kind: input, shape index: {}]
  %s3 = inlined_call_operand.hbm [shape: f32[4,8,32], index: 3, kind: output, shape index: {}]
  %s4 = sld [smem:[#allocation0]]
  $region57: #{fwd.1} parent=0
    _
  %s6 = ssub.s32 1, %s4
  %s7 = scalar_select 0, %s6, %s4
  $region1: #{fwd.1} parent=0
    #allocation2 [shape = 'u8[8192]{0}', space=vmem, size = 0x2000, scoped, tag = 'input window, operand 0']
    #allocation3 [shape = 's32[2]{0}', space=sflag, size = 0x8, scoped, tag = 'scoped memory for fwd.1']
    #allocation4 [shape = 's32[2]{0}', space=sflag, size = 0x8, scoped, tag = 'scoped memory for fwd.1']
    #allocation5 [shape = 'u8[98304]{0}', space=vmem, size = 0x18000, scoped, tag = 'input window, operand 1, single buffered']
    #allocation6 [shape = 's32[1]{0}', space=sflag, size = 0x4, scoped, tag = 'scoped memory for fwd.1']
    #allocation7 [shape = 'u8[8192]{0}', space=vmem, size = 0x2000, scoped, tag = 'input window, operand 2, single buffered']
    #allocation8 [shape = 'u8[8192]{0}', space=vmem, size = 0x2000, scoped, tag = 'output window, operand 0']
    %8 = vsyncpa [#allocation3], 0
    %s9 = scalar_lea.sflag [#allocation3], 1
    %10 = vsyncpa %s9, 0
    %11 = vsyncpa [#allocation6], 0
    %12 = vsyncpa [#allocation4], 0
    %s13 = scalar_lea.sflag [#allocation4], 1
    %14 = vsyncpa %s13, 0
    loop: start=0, step=1, limit=6
    $region2: #{fwd.1} parent=1 // loop_pre_header
      _
    $region3: #{fwd.1} parent=1 // loop_header
      %s16 = sphi 0, %s20
      %p17 = scmp.ge.s32.totalorder %s16, 6
      %s26 = sphi 0, %s28
      %s29 = sphi 0, %s26
      %s30 = sphi 0, %s29
      %s46 = sphi 0, %s30
      %s50 = sphi 0, %s50
      %s52 = sphi 0, %s50
      %s53 = sphi 0, %s52
      %s67 = sphi 0, %s53
      %s71 = sphi 0, %s71
      %s73 = sphi 0, %s71
      %s74 = sphi 0, %s73
      %s88 = sphi 0, %s74
      %s94 = sphi 0, %s96
      %s97 = sphi 0, %s94
      %s98 = sphi 0, %s97
      %s114 = sphi 0, %s98
    $region4: #{fwd.1} parent=1 // loop_header_branch
      %19 = sbr.rel (%p17) target = $region8
    $region5: #{fwd.1} parent=1 // loop_body
      %s21 = ssub.s32 %s16, 1
      %s22 = ssub.s32 %s16, 2
      %s23 = sadd.s32 %s16, 1
      %s24 = ssub.s32 %s16, %s23
      %p25 = scmp.eq.s32.totalorder %s24, 0
      %s27 = sadd.s32 %s26, 1
      %s28 = scalar_select %p25, %s26, %s27
      %p31 = pneg %p25
      %p32 = scmp.eq.s32.totalorder %s16, 3
      %p33 = por %p31, %p32
      %p34 = scmp.ne.s32.totalorder %s26, %s29
      %p35 = scmp.eq.s32.totalorder %s16, 0
      %p36 = por %p34, %p35
      %p37 = scmp.ne.s32.totalorder %s26, %s29
      %p38 = scmp.eq.s32.totalorder %s21, 3
      %p39 = por %p37, %p38
      %p40 = scmp.ne.s32.totalorder %s29, %s30
      %p41 = scmp.eq.s32.totalorder %s21, 0
      %p42 = por %p40, %p41
      %p43 = scmp.ne.s32.totalorder %s29, %s30
      %p44 = scmp.eq.s32.totalorder %s22, 3
      %p45 = por %p43, %p44
      %p47 = scmp.ne.s32.totalorder %s30, %s46
      %p48 = scmp.eq.s32.totalorder %s22, 0
      %p49 = por %p47, %p48
      %s51 = sadd.s32 %s50, 1
      %p54 = scmp.eq.s32.totalorder %s16, 3
      %p55 = scmp.ne.s32.totalorder %s50, %s52
      %p56 = scmp.eq.s32.totalorder %s16, 0
      %p57 = por %p55, %p56
      %p58 = scmp.ne.s32.totalorder %s50, %s52
      %p59 = scmp.eq.s32.totalorder %s21, 3
      %p60 = por %p58, %p59
      %p61 = scmp.ne.s32.totalorder %s52, %s53
      %p62 = scmp.eq.s32.totalorder %s21, 0
      %p63 = por %p61, %p62
      %p64 = scmp.ne.s32.totalorder %s52, %s53
      %p65 = scmp.eq.s32.totalorder %s22, 3
      %p66 = por %p64, %p65
      %p68 = scmp.ne.s32.totalorder %s53, %s67
      %p69 = scmp.eq.s32.totalorder %s22, 0
      %p70 = por %p68, %p69
      %s72 = sadd.s32 %s71, 1
      %p75 = scmp.eq.s32.totalorder %s16, 3
      %p76 = scmp.ne.s32.totalorder %s71, %s73
      %p77 = scmp.eq.s32.totalorder %s16, 0
      %p78 = por %p76, %p77
      %p79 = scmp.ne.s32.totalorder %s71, %s73
      %p80 = scmp.eq.s32.totalorder %s21, 3
      %p81 = por %p79, %p80
      %p82 = scmp.ne.s32.totalorder %s73, %s74
      %p83 = scmp.eq.s32.totalorder %s21, 0
      %p84 = por %p82, %p83
      %p85 = scmp.ne.s32.totalorder %s73, %s74
      %p86 = scmp.eq.s32.totalorder %s22, 3
      %p87 = por %p85, %p86
      %p89 = scmp.ne.s32.totalorder %s74, %s88
      %p90 = scmp.eq.s32.totalorder %s22, 0
      %p91 = por %p89, %p90
      %s92 = ssub.s32 %s16, %s23
      %p93 = scmp.eq.s32.totalorder %s92, 0
      %s95 = sadd.s32 %s94, 1
      %s96 = scalar_select %p93, %s94, %s95
      %p99 = pneg %p93
      %p100 = scmp.eq.s32.totalorder %s16, 3
      %p101 = por %p99, %p100
      %p102 = scmp.ne.s32.totalorder %s94, %s97
      %p103 = scmp.eq.s32.totalorder %s16, 0
      %p104 = por %p102, %p103
      %p105 = scmp.ne.s32.totalorder %s94, %s97
      %p106 = scmp.eq.s32.totalorder %s21, 3
      %p107 = por %p105, %p106
      %p108 = scmp.ne.s32.totalorder %s97, %s98
      %p109 = scmp.eq.s32.totalorder %s21, 0
      %p110 = por %p108, %p109
      %p111 = scmp.ne.s32.totalorder %s97, %s98
      %p112 = scmp.eq.s32.totalorder %s22, 3
      %p113 = por %p111, %p112
      %p115 = scmp.ne.s32.totalorder %s98, %s114
      %p116 = scmp.eq.s32.totalorder %s22, 0
      %p117 = por %p115, %p116
      %p118 = scmp.le.s32.totalorder 1, %s16
      %p119 = scmp.lt.s32.totalorder %s16, 5
      %p120 = pnand %p118, %p119
      %p121 = pneg %p120
      // Predicated region
      $region9: #{fwd.1} parent=5 // pred_check
        _
      $region10: #{fwd.1} parent=5 // pred_check_branch
        %123 = sbr.rel (%p120) target = $region12
      $region11: #{fwd.1} parent=5 // pred_region
        %s124 = ssub.s32 %s16, 1
        // Predicated region
        $region13: #{fwd.1} parent=11 // pred_check
          %p125 = pneg %p63
        $region14: #{fwd.1} parent=11 // pred_check_branch
          %127 = sbr.rel (%p125) target = $region16
        $region15: #{fwd.1} parent=11 // pred_region
          %s129 = ssub.s32 3072, 3072
          %130 = vsyncadd [#allocation6], %s129
          %s131 = sshll.u32 [#allocation5], 4
          %s132 = int_to_ptr.vmem [resolvable:$true] %s131
          %137 = dma.hbm_to_vmem [thread:$0]  %s1, 3072, %s132, [#allocation6], 128, 128, 8
        $region16: #{fwd.1} parent=11 // pred_fallthru
          _
        // Predicated region
        $region17: #{fwd.1} parent=11 // pred_check
          %p138 = pneg %p84
        $region18: #{fwd.1} parent=11 // pred_check_branch
          %140 = sbr.rel (%p138) target = $region20
        $region19: #{fwd.1} parent=11 // pred_region
          %s142 = ssub.s32 256, 256
          %143 = vsyncadd [#allocation6], %s142
          %s144 = sshll.u32 [#allocation7], 4
          %s145 = int_to_ptr.vmem [resolvable:$true] %s144
          %150 = dma.hbm_to_vmem [thread:$0]  %s2, 256, %s145, [#allocation6], 128, 128, 8
        $region20: #{fwd.1} parent=11 // pred_fallthru
          _
      $region12: #{fwd.1} parent=5 // pred_fallthru
        _
      %p151 = scmp.lt.s32.totalorder %s16, 4
      // Predicated region
      $region21: #{fwd.1} parent=5 // pred_check
        %p152 = pneg %p151
      $region22: #{fwd.1} parent=5 // pred_check_branch
        %154 = sbr.rel (%p152) target = $region24
      $region23: #{fwd.1} parent=5 // pred_region
        // Predicated region
        $region25: #{fwd.1} parent=23 // pred_check
          %p155 = pneg %p36
        $region26: #{fwd.1} parent=23 // pred_check_branch
          %157 = sbr.rel (%p155) target = $region28
        $region27: #{fwd.1} parent=23 // pred_region
          %s158 = sand.u32 %s26, 1
          %s159 = scalar_lea.sflag [#allocation3], %s158
          %s160 = sand.u32 %s26, 1
          %s161 = smul.addr %s160, 8
          %s162 = scalar_lea.vmem [#allocation2], %s161
          %s164 = ssub.s32 128, 128
          %165 = vsyncadd %s159, %s164
          %s166 = smul.addr %s16, 128
          %s167 = scalar_lea.hbm %s0, %s166
          %s169 = sshll.u32 %s162, 4
          %s170 = int_to_ptr.vmem [resolvable:$true] %s169
          %172 = dma.hbm_to_vmem [thread:$0]  %s167, 128, %s170, %s159
        $region28: #{fwd.1} parent=23 // pred_fallthru
          _
      $region24: #{fwd.1} parent=5 // pred_fallthru
        _
      %p173 = scmp.le.s32.totalorder 1, %s16
      %p174 = scmp.lt.s32.totalorder %s16, 5
      %p175 = pnand %p173, %p174
      %p176 = pneg %p175
      // Predicated region
      $region29: #{fwd.1} parent=5 // pred_check
        _
      $region30: #{fwd.1} parent=5 // pred_check_branch
        %178 = sbr.rel (%p175) target = $region32
      $region31: #{fwd.1} parent=5 // pred_region
        %s179 = ssub.s32 %s16, 1
        %s180 = sand.u32 %s29, 1
        %s181 = scalar_lea.sflag [#allocation3], %s180
        %s182 = sand.u32 %s29, 1
        %s183 = smul.addr %s182, 8
        %s184 = scalar_lea.vmem [#allocation2], %s183
        // Predicated region
        $region33: #{fwd.1} parent=31 // pred_check
          %p185 = pneg %p42
        $region34: #{fwd.1} parent=31 // pred_check_branch
          %187 = sbr.rel (%p185) target = $region36
        $region35: #{fwd.1} parent=31 // pred_region
          %188 = dma.done %s181, 128
        $region36: #{fwd.1} parent=31 // pred_fallthru
          _
        // Predicated region
        $region37: #{fwd.1} parent=31 // pred_check
          %p189 = pneg %p63
        $region38: #{fwd.1} parent=31 // pred_check_branch
          %191 = sbr.rel (%p189) target = $region40
        $region39: #{fwd.1} parent=31 // pred_region
          %192 = dma.done [#allocation6], 3072
        $region40: #{fwd.1} parent=31 // pred_fallthru
          _
        // Predicated region
        $region41: #{fwd.1} parent=31 // pred_check
          %p193 = pneg %p84
        $region42: #{fwd.1} parent=31 // pred_check_branch
          %195 = sbr.rel (%p193) target = $region44
        $region43: #{fwd.1} parent=31 // pred_region
          %196 = dma.done [#allocation6], 256
        $region44: #{fwd.1} parent=31 // pred_fallthru
          _
        %s197 = sand.u32 %s29, 1
        %s198 = scalar_lea.sflag [#allocation3], %s197
        %s199 = sand.u32 %s29, 1
        %s200 = smul.addr %s199, 8
        %s201 = scalar_lea.vmem [#allocation2], %s200
        %p202 = pneg %p42
        %p203 = pneg %p39
        %p204 = pneg %p63
        %p205 = pneg %p60
        %p206 = pneg %p84
        %p207 = pneg %p81
        %p208 = pneg %p110
        %p209 = pneg %p107
        %s210 = sand.u32 %s97, 1
        %s211 = scalar_lea.sflag [#allocation4], %s210
        %s212 = sand.u32 %s97, 1
        %s213 = smul.addr %s212, 8
        %s214 = scalar_lea.vmem [#allocation8], %s213
        %v215 = vld [vmem:[#allocation7] sm:$0xff]
        %v216 = vld [vmem:[#allocation7 + $0x8] sm:$0x7]
        %v217 = vld [vmem:[%s184] sm:$0xff]
        %v218 = vld [vmem:[#allocation5] sm:$0xff]
        %v219 = vld [vmem:[#allocation5 + $0x8] sm:$0xff]
        %v220 = vld [vmem:[#allocation5 + $0x10] sm:$0xff]
        %v221 = vld [vmem:[#allocation5 + $0x18] sm:$0xff]
        %vm222 = vcmask 261120
        %v224 = vsel %vm222, %v217, 0
        %226 = vmatprep.subr.mxu0 0.0
        %227 = vmatpush1.msra.mxu0 %v218
        %228 = vmatprep.subr.mxu0 0.0
        %229 = vmatpush1.msra.mxu0 %v219
        %230 = vmatprep.subr.mxu0 0.0
        %231 = vmatpush1.msra.mxu0 %v220
        %232 = vmatprep.subr.mxu0 0.0
        %233 = vmatpush1.msra.mxu0 %v221
        %234 = vmatprep.subr.mxu0 0.0
        %235 = vmatpush1.msra.mxu0 0.0
        %236 = vmatprep.subr.mxu0 0.0
        %237 = vmatpush1.msra.mxu0 0.0
        %238 = vmatprep.subr.mxu0 0.0
        %239 = vmatpush1.msra.mxu0 0.0
        %240 = vmatprep.subr.mxu0 0.0
        %241 = vmatpush1.msra.mxu0 0.0
        %242 = vmatprep.subr.mxu0 0.0
        %243 = vmatpush1.msra.mxu0 0.0
        %244 = vmatprep.subr.mxu0 0.0
        %245 = vmatpush1.msra.mxu0 0.0
        %246 = vmatprep.subr.mxu0 0.0
        %247 = vmatpush1.msra.mxu0 0.0
        %248 = vmatprep.subr.mxu0 0.0
        %249 = vmatpush1.msra.mxu0 0.0
        %250 = vmatprep.subr.mxu0 0.0
        %251 = vmatpush1.msra.mxu0 0.0
        %252 = vmatprep.subr.mxu0 0.0
        %253 = vmatpush1.msra.mxu0 0.0
        %254 = vmatprep.subr.mxu0 0.0
        %255 = vmatpush1.msra.mxu0 0.0
        %256 = vmatprep.subr.mxu0 0.0
        %257 = vmatpush1.msra.mxu0 0.0
        %258 = vmatprep.subr.mxu0 0.0
        %259 = vmatpush1.msra.mxu0 0.0
        %260 = vmatprep.subr.mxu0 0.0
        %261 = vmatpush1.msra.mxu0 0.0
        %262 = vmatprep.subr.mxu0 0.0
        %263 = vmatpush1.msra.mxu0 0.0
        %264 = vmatprep.subr.mxu0 0.0
        %265 = vmatpush1.msra.mxu0 0.0
        %266 = vmatprep.subr.mxu0 0.0
        %267 = vmatpush1.msra.mxu0 0.0
        %268 = vmatprep.subr.mxu0 0.0
        %269 = vmatpush1.msra.mxu0 0.0
        %270 = vmatprep.subr.mxu0 0.0
        %271 = vmatpush1.msra.mxu0 0.0
        %272 = vmatprep.subr.mxu0 0.0
        %273 = vmatpush1.msra.mxu0 0.0
        %274 = vmatprep.subr.mxu0 0.0
        %275 = vmatpush1.msra.mxu0 0.0
        %276 = vmatprep.subr.mxu0 0.0
        %277 = vmatpush1.msra.mxu0 0.0
        %278 = vmatprep.subr.mxu0 0.0
        %279 = vmatpush1.msra.mxu0 0.0
        %280 = vmatprep.subr.mxu0 0.0
        %281 = vmatpush1.msra.mxu0 0.0
        %282 = vmatprep.subr.mxu0 0.0
        %283 = vmatpush1.msra.mxu0 0.0
        %284 = vmatprep.subr.mxu0 0.0
        %285 = vmatpush1.msra.mxu0 0.0
        %286 = vmatprep.subr.mxu0 0.0
        %287 = vmatpush1.msra.mxu0 0.0
        %288 = vmatprep.subr.mxu0 0.0
        %289 = vmatpush1.msra.mxu0 0.0
        %290 = vmatprep.mubr.f32.mxu0 0.0
        %291 = vmatmul.mubr.f32.gmra.mrb[0].mxu0 %v224
        %v292 = vpop.f32.mrb[0].mxu0
        %v293 = vadd.f32 0.0, %v292
        %v294 = vpop.f32.mrb[0].mxu0
        %295 = vdwg.mxu0
        %v296 = vsel %vm222, %v293, 0.0
        %v297 = vrot.slane %v296, 4
        %v298 = vadd.f32 %v296, %v297
        %v299 = vrot.slane %v298, 2
        %v300 = vadd.f32 %v298, %v299
        %v301 = vrot.slane %v300, 1
        %v302 = vadd.f32 %v300, %v301
        %v303 = vrcp.pop 8.0
        %v304 = vmul.f32 %v302, %v303
        %v305 = vmul.f32 %v293, %v293
        %v306 = vsel %vm222, %v305, 0.0
        %v307 = vrot.slane %v306, 4
        %v308 = vadd.f32 %v306, %v307
        %v309 = vrot.slane %v308, 2
        %v310 = vadd.f32 %v308, %v309
        %v311 = vrot.slane %v310, 1
        %v312 = vadd.f32 %v310, %v311
        %v313 = vmul.f32 %v312, %v303
        %v314 = vmul.f32 %v304, %v304
        %v315 = vsub.f32 %v313, %v314
        %v316 = vadd.f32 %v315, 1e-05
        %v317 = vrsqrt.pop %v316
        %v318 = vmul.f32 %v215, %v317
        %v319 = vmul.f32 %v304, %v318
        %v321 = vrot.slane %v319, 7
        %v323 = vsub.f32 %v215, %v321
        %v324 = vlaneseq
        %v325 = vshrl.u32 %v324, 7
        %v326 = vsub.s32 0, %v325
        %v327 = vrot.slane %v318, %v326
        %v328 = vmul.f32 %v293, %v327
        %v329 = vlaneseq
        %v330 = vshrl.u32 %v329, 7
        %v331 = vsub.s32 1, %v330
        %v332 = vrot.slane %v323, %v331
        %v333 = vadd.f32 %v328, %v332
        %v334 = vmax.f32 %v333, 0.0
        %s335 = scalar_lea.vmem [#allocation5], 32
        %v336 = vld [vmem:[%s335] sm:$0xff]
        %v337 = vld [vmem:[%s335 + $0x8] sm:$0xff]
        %v338 = vld [vmem:[%s335 + $0x10] sm:$0xff]
        %v339 = vld [vmem:[%s335 + $0x18] sm:$0xff]
        %v341 = vsel %vm222, %v334, 0
        %343 = vmatprep.subr.mxu0 0.0
        %344 = vmatpush1.msra.mxu0 %v336
        %345 = vmatprep.subr.mxu0 0.0
        %346 = vmatpush1.msra.mxu0 %v337
        %347 = vmatprep.subr.mxu0 0.0
        %348 = vmatpush1.msra.mxu0 %v338
        %349 = vmatprep.subr.mxu0 0.0
        %350 = vmatpush1.msra.mxu0 %v339
        %351 = vmatprep.subr.mxu0 0.0
        %352 = vmatpush1.msra.mxu0 0.0
        %353 = vmatprep.subr.mxu0 0.0
        %354 = vmatpush1.msra.mxu0 0.0
        %355 = vmatprep.subr.mxu0 0.0
        %356 = vmatpush1.msra.mxu0 0.0
        %357 = vmatprep.subr.mxu0 0.0
        %358 = vmatpush1.msra.mxu0 0.0
        %359 = vmatprep.subr.mxu0 0.0
        %360 = vmatpush1.msra.mxu0 0.0
        %361 = vmatprep.subr.mxu0 0.0
        %362 = vmatpush1.msra.mxu0 0.0
        %363 = vmatprep.subr.mxu0 0.0
        %364 = vmatpush1.msra.mxu0 0.0
        %365 = vmatprep.subr.mxu0 0.0
        %366 = vmatpush1.msra.mxu0 0.0
        %367 = vmatprep.subr.mxu0 0.0
        %368 = vmatpush1.msra.mxu0 0.0
        %369 = vmatprep.subr.mxu0 0.0
        %370 = vmatpush1.msra.mxu0 0.0
        %371 = vmatprep.subr.mxu0 0.0
        %372 = vmatpush1.msra.mxu0 0.0
        %373 = vmatprep.subr.mxu0 0.0
        %374 = vmatpush1.msra.mxu0 0.0
        %375 = vmatprep.subr.mxu0 0.0
        %376 = vmatpush1.msra.mxu0 0.0
        %377 = vmatprep.subr.mxu0 0.0
        %378 = vmatpush1.msra.mxu0 0.0
        %379 = vmatprep.subr.mxu0 0.0
        %380 = vmatpush1.msra.mxu0 0.0
        %381 = vmatprep.subr.mxu0 0.0
        %382 = vmatpush1.msra.mxu0 0.0
        %383 = vmatprep.subr.mxu0 0.0
        %384 = vmatpush1.msra.mxu0 0.0
        %385 = vmatprep.subr.mxu0 0.0
        %386 = vmatpush1.msra.mxu0 0.0
        %387 = vmatprep.subr.mxu0 0.0
        %388 = vmatpush1.msra.mxu0 0.0
        %389 = vmatprep.subr.mxu0 0.0
        %390 = vmatpush1.msra.mxu0 0.0
        %391 = vmatprep.subr.mxu0 0.0
        %392 = vmatpush1.msra.mxu0 0.0
        %393 = vmatprep.subr.mxu0 0.0
        %394 = vmatpush1.msra.mxu0 0.0
        %395 = vmatprep.subr.mxu0 0.0
        %396 = vmatpush1.msra.mxu0 0.0
        %397 = vmatprep.subr.mxu0 0.0
        %398 = vmatpush1.msra.mxu0 0.0
        %399 = vmatprep.subr.mxu0 0.0
        %400 = vmatpush1.msra.mxu0 0.0
        %401 = vmatprep.subr.mxu0 0.0
        %402 = vmatpush1.msra.mxu0 0.0
        %403 = vmatprep.subr.mxu0 0.0
        %404 = vmatpush1.msra.mxu0 0.0
        %405 = vmatprep.subr.mxu0 0.0
        %406 = vmatpush1.msra.mxu0 0.0
        %407 = vmatprep.mubr.f32.mxu0 0.0
        %408 = vmatmul.mubr.f32.gmra.mrb[0].mxu0 %v341
        %v409 = vpop.f32.mrb[0].mxu0
        %v410 = vadd.f32 0.0, %v409
        %v411 = vpop.f32.mrb[0].mxu0
        %412 = vdwg.mxu0
        %v413 = vsel %vm222, %v410, 0.0
        %v414 = vrot.slane %v413, 4
        %v415 = vadd.f32 %v413, %v414
        %v416 = vrot.slane %v415, 2
        %v417 = vadd.f32 %v415, %v416
        %v418 = vrot.slane %v417, 1
        %v419 = vadd.f32 %v417, %v418
        %v420 = vmul.f32 %v419, %v303
        %v421 = vmul.f32 %v410, %v410
        %v422 = vsel %vm222, %v421, 0.0
        %v423 = vrot.slane %v422, 4
        %v424 = vadd.f32 %v422, %v423
        %v425 = vrot.slane %v424, 2
        %v426 = vadd.f32 %v424, %v425
        %v427 = vrot.slane %v426, 1
        %v428 = vadd.f32 %v426, %v427
        %v429 = vmul.f32 %v428, %v303
        %v430 = vmul.f32 %v420, %v420
        %v431 = vsub.f32 %v429, %v430
        %v432 = vadd.f32 %v431, 1e-05
        %v433 = vrsqrt.pop %v432
        %v434 = vmul.f32 %v215, %v433
        %v435 = vmul.f32 %v420, %v434
        %v437 = vrot.slane %v435, 7
        %v439 = vsub.f32 %v215, %v437
        %v440 = vlaneseq
        %v441 = vshrl.u32 %v440, 7
        %v442 = vsub.s32 2, %v441
        %v443 = vrot.slane %v434, %v442
        %v444 = vmul.f32 %v410, %v443
        %v445 = vlaneseq
        %v446 = vshrl.u32 %v445, 7
        %v447 = vsub.s32 3, %v446
        %v448 = vrot.slane %v439, %v447
        %v449 = vadd.f32 %v444, %v448
        %v450 = vmax.f32 %v449, 0.0
        %s451 = scalar_lea.vmem [#allocation5], 64
        %v452 = vld [vmem:[%s451] sm:$0xff]
        %v453 = vld [vmem:[%s451 + $0x8] sm:$0xff]
        %v454 = vld [vmem:[%s451 + $0x10] sm:$0xff]
        %v455 = vld [vmem:[%s451 + $0x18] sm:$0xff]
        %v457 = vsel %vm222, %v450, 0
        %459 = vmatprep.subr.mxu0 0.0
        %460 = vmatpush1.msra.mxu0 %v452
        %461 = vmatprep.subr.mxu0 0.0
        %462 = vmatpush1.msra.mxu0 %v453
        %463 = vmatprep.subr.mxu0 0.0
        %464 = vmatpush1.msra.mxu0 %v454
        %465 = vmatprep.subr.mxu0 0.0
        %466 = vmatpush1.msra.mxu0 %v455
        %467 = vmatprep.subr.mxu0 0.0
        %468 = vmatpush1.msra.mxu0 0.0
        %469 = vmatprep.subr.mxu0 0.0
        %470 = vmatpush1.msra.mxu0 0.0
        %471 = vmatprep.subr.mxu0 0.0
        %472 = vmatpush1.msra.mxu0 0.0
        %473 = vmatprep.subr.mxu0 0.0
        %474 = vmatpush1.msra.mxu0 0.0
        %475 = vmatprep.subr.mxu0 0.0
        %476 = vmatpush1.msra.mxu0 0.0
        %477 = vmatprep.subr.mxu0 0.0
        %478 = vmatpush1.msra.mxu0 0.0
        %479 = vmatprep.subr.mxu0 0.0
        %480 = vmatpush1.msra.mxu0 0.0
        %481 = vmatprep.subr.mxu0 0.0
        %482 = vmatpush1.msra.mxu0 0.0
        %483 = vmatprep.subr.mxu0 0.0
        %484 = vmatpush1.msra.mxu0 0.0
        %485 = vmatprep.subr.mxu0 0.0
        %486 = vmatpush1.msra.mxu0 0.0
        %487 = vmatprep.subr.mxu0 0.0
        %488 = vmatpush1.msra.mxu0 0.0
        %489 = vmatprep.subr.mxu0 0.0
        %490 = vmatpush1.msra.mxu0 0.0
        %491 = vmatprep.subr.mxu0 0.0
        %492 = vmatpush1.msra.mxu0 0.0
        %493 = vmatprep.subr.mxu0 0.0
        %494 = vmatpush1.msra.mxu0 0.0
        %495 = vmatprep.subr.mxu0 0.0
        %496 = vmatpush1.msra.mxu0 0.0
        %497 = vmatprep.subr.mxu0 0.0
        %498 = vmatpush1.msra.mxu0 0.0
        %499 = vmatprep.subr.mxu0 0.0
        %500 = vmatpush1.msra.mxu0 0.0
        %501 = vmatprep.subr.mxu0 0.0
        %502 = vmatpush1.msra.mxu0 0.0
        %503 = vmatprep.subr.mxu0 0.0
        %504 = vmatpush1.msra.mxu0 0.0
        %505 = vmatprep.subr.mxu0 0.0
        %506 = vmatpush1.msra.mxu0 0.0
        %507 = vmatprep.subr.mxu0 0.0
        %508 = vmatpush1.msra.mxu0 0.0
        %509 = vmatprep.subr.mxu0 0.0
        %510 = vmatpush1.msra.mxu0 0.0
        %511 = vmatprep.subr.mxu0 0.0
        %512 = vmatpush1.msra.mxu0 0.0
        %513 = vmatprep.subr.mxu0 0.0
        %514 = vmatpush1.msra.mxu0 0.0
        %515 = vmatprep.subr.mxu0 0.0
        %516 = vmatpush1.msra.mxu0 0.0
        %517 = vmatprep.subr.mxu0 0.0
        %518 = vmatpush1.msra.mxu0 0.0
        %519 = vmatprep.subr.mxu0 0.0
        %520 = vmatpush1.msra.mxu0 0.0
        %521 = vmatprep.subr.mxu0 0.0
        %522 = vmatpush1.msra.mxu0 0.0
        %523 = vmatprep.mubr.f32.mxu0 0.0
        %524 = vmatmul.mubr.f32.gmra.mrb[0].mxu0 %v457
        %v525 = vpop.f32.mrb[0].mxu0
        %v526 = vadd.f32 0.0, %v525
        %v527 = vpop.f32.mrb[0].mxu0
        %528 = vdwg.mxu0
        %v529 = vsel %vm222, %v526, 0.0
        %v530 = vrot.slane %v529, 4
        %v531 = vadd.f32 %v529, %v530
        %v532 = vrot.slane %v531, 2
        %v533 = vadd.f32 %v531, %v532
        %v534 = vrot.slane %v533, 1
        %v535 = vadd.f32 %v533, %v534
        %v536 = vmul.f32 %v535, %v303
        %v537 = vmul.f32 %v526, %v526
        %v538 = vsel %vm222, %v537, 0.0
        %v539 = vrot.slane %v538, 4
        %v540 = vadd.f32 %v538, %v539
        %v541 = vrot.slane %v540, 2
        %v542 = vadd.f32 %v540, %v541
        %v543 = vrot.slane %v542, 1
        %v544 = vadd.f32 %v542, %v543
        %v545 = vmul.f32 %v544, %v303
        %v546 = vmul.f32 %v536, %v536
        %v547 = vsub.f32 %v545, %v546
        %v548 = vadd.f32 %v547, 1e-05
        %v549 = vrsqrt.pop %v548
        %v550 = vmul.f32 %v215, %v549
        %v551 = vmul.f32 %v536, %v550
        %v553 = vrot.slane %v551, 7
        %v555 = vsub.f32 %v215, %v553
        %v556 = vlaneseq
        %v557 = vshrl.u32 %v556, 7
        %v558 = vsub.s32 4, %v557
        %v559 = vrot.slane %v550, %v558
        %v560 = vmul.f32 %v526, %v559
        %v561 = vlaneseq
        %v562 = vshrl.u32 %v561, 7
        %v563 = vsub.s32 5, %v562
        %v564 = vrot.slane %v555, %v563
        %v565 = vadd.f32 %v560, %v564
        %v566 = vmax.f32 %v565, 0.0
        %s567 = scalar_lea.vmem [#allocation5], 96
        %v568 = vld [vmem:[%s567] sm:$0xff]
        %v569 = vld [vmem:[%s567 + $0x8] sm:$0xff]
        %v570 = vld [vmem:[%s567 + $0x10] sm:$0xff]
        %v571 = vld [vmem:[%s567 + $0x18] sm:$0xff]
        %v573 = vsel %vm222, %v566, 0
        %575 = vmatprep.subr.mxu0 0.0
        %576 = vmatpush1.msra.mxu0 %v568
        %577 = vmatprep.subr.mxu0 0.0
        %578 = vmatpush1.msra.mxu0 %v569
        %579 = vmatprep.subr.mxu0 0.0
        %580 = vmatpush1.msra.mxu0 %v570
        %581 = vmatprep.subr.mxu0 0.0
        %582 = vmatpush1.msra.mxu0 %v571
        %583 = vmatprep.subr.mxu0 0.0
        %584 = vmatpush1.msra.mxu0 0.0
        %585 = vmatprep.subr.mxu0 0.0
        %586 = vmatpush1.msra.mxu0 0.0
        %587 = vmatprep.subr.mxu0 0.0
        %588 = vmatpush1.msra.mxu0 0.0
        %589 = vmatprep.subr.mxu0 0.0
        %590 = vmatpush1.msra.mxu0 0.0
        %591 = vmatprep.subr.mxu0 0.0
        %592 = vmatpush1.msra.mxu0 0.0
        %593 = vmatprep.subr.mxu0 0.0
        %594 = vmatpush1.msra.mxu0 0.0
        %595 = vmatprep.subr.mxu0 0.0
        %596 = vmatpush1.msra.mxu0 0.0
        %597 = vmatprep.subr.mxu0 0.0
        %598 = vmatpush1.msra.mxu0 0.0
        %599 = vmatprep.subr.mxu0 0.0
        %600 = vmatpush1.msra.mxu0 0.0
        %601 = vmatprep.subr.mxu0 0.0
        %602 = vmatpush1.msra.mxu0 0.0
        %603 = vmatprep.subr.mxu0 0.0
        %604 = vmatpush1.msra.mxu0 0.0
        %605 = vmatprep.subr.mxu0 0.0
        %606 = vmatpush1.msra.mxu0 0.0
        %607 = vmatprep.subr.mxu0 0.0
        %608 = vmatpush1.msra.mxu0 0.0
        %609 = vmatprep.subr.mxu0 0.0
        %610 = vmatpush1.msra.mxu0 0.0
        %611 = vmatprep.subr.mxu0 0.0
        %612 = vmatpush1.msra.mxu0 0.0
        %613 = vmatprep.subr.mxu0 0.0
        %614 = vmatpush1.msra.mxu0 0.0
        %615 = vmatprep.subr.mxu0 0.0
        %616 = vmatpush1.msra.mxu0 0.0
        %617 = vmatprep.subr.mxu0 0.0
        %618 = vmatpush1.msra.mxu0 0.0
        %619 = vmatprep.subr.mxu0 0.0
        %620 = vmatpush1.msra.mxu0 0.0
        %621 = vmatprep.subr.mxu0 0.0
        %622 = vmatpush1.msra.mxu0 0.0
        %623 = vmatprep.subr.mxu0 0.0
        %624 = vmatpush1.msra.mxu0 0.0
        %625 = vmatprep.subr.mxu0 0.0
        %626 = vmatpush1.msra.mxu0 0.0
        %627 = vmatprep.subr.mxu0 0.0
        %628 = vmatpush1.msra.mxu0 0.0
        %629 = vmatprep.subr.mxu0 0.0
        %630 = vmatpush1.msra.mxu0 0.0
        %631 = vmatprep.subr.mxu0 0.0
        %632 = vmatpush1.msra.mxu0 0.0
        %633 = vmatprep.subr.mxu0 0.0
        %634 = vmatpush1.msra.mxu0 0.0
        %635 = vmatprep.subr.mxu0 0.0
        %636 = vmatpush1.msra.mxu0 0.0
        %637 = vmatprep.subr.mxu0 0.0
        %638 = vmatpush1.msra.mxu0 0.0
        %639 = vmatprep.mubr.f32.mxu0 0.0
        %640 = vmatmul.mubr.f32.gmra.mrb[0].mxu0 %v573
        %v641 = vpop.f32.mrb[0].mxu0
        %v642 = vadd.f32 0.0, %v641
        %v643 = vpop.f32.mrb[0].mxu0
        %644 = vdwg.mxu0
        %v645 = vsel %vm222, %v642, 0.0
        %v646 = vrot.slane %v645, 4
        %v647 = vadd.f32 %v645, %v646
        %v648 = vrot.slane %v647, 2
        %v649 = vadd.f32 %v647, %v648
        %v650 = vrot.slane %v649, 1
        %v651 = vadd.f32 %v649, %v650
        %v652 = vmul.f32 %v651, %v303
        %v653 = vmul.f32 %v642, %v642
        %v654 = vsel %vm222, %v653, 0.0
        %v655 = vrot.slane %v654, 4
        %v656 = vadd.f32 %v654, %v655
        %v657 = vrot.slane %v656, 2
        %v658 = vadd.f32 %v656, %v657
        %v659 = vrot.slane %v658, 1
        %v660 = vadd.f32 %v658, %v659
        %v661 = vmul.f32 %v660, %v303
        %v662 = vmul.f32 %v652, %v652
        %v663 = vsub.f32 %v661, %v662
        %v664 = vadd.f32 %v663, 1e-05
        %v665 = vrsqrt.pop %v664
        %v666 = vmul.f32 %v215, %v665
        %v667 = vmul.f32 %v652, %v666
        %v669 = vrot.slane %v667, 7
        %v671 = vsub.f32 %v215, %v669
        %v672 = vlaneseq
        %v673 = vshrl.u32 %v672, 7
        %v674 = vsub.s32 6, %v673
        %v675 = vrot.slane %v666, %v674
        %v676 = vmul.f32 %v642, %v675
        %v677 = vlaneseq
        %v678 = vshrl.u32 %v677, 7
        %v679 = vsub.s32 7, %v678
        %v680 = vrot.slane %v671, %v679
        %v681 = vadd.f32 %v676, %v680
        %v682 = vmax.f32 %v681, 0.0
        %s683 = scalar_lea.vmem [#allocation5], 128
        %v684 = vld [vmem:[%s683] sm:$0xff]
        %v685 = vld [vmem:[%s683 + $0x8] sm:$0xff]
        %v686 = vld [vmem:[%s683 + $0x10] sm:$0xff]
        %v687 = vld [vmem:[%s683 + $0x18] sm:$0xff]
        %v689 = vsel %vm222, %v682, 0
        %691 = vmatprep.subr.mxu0 0.0
        %692 = vmatpush1.msra.mxu0 %v684
        %693 = vmatprep.subr.mxu0 0.0
        %694 = vmatpush1.msra.mxu0 %v685
        %695 = vmatprep.subr.mxu0 0.0
        %696 = vmatpush1.msra.mxu0 %v686
        %697 = vmatprep.subr.mxu0 0.0
        %698 = vmatpush1.msra.mxu0 %v687
        %699 = vmatprep.subr.mxu0 0.0
        %700 = vmatpush1.msra.mxu0 0.0
        %701 = vmatprep.subr.mxu0 0.0
        %702 = vmatpush1.msra.mxu0 0.0
        %703 = vmatprep.subr.mxu0 0.0
        %704 = vmatpush1.msra.mxu0 0.0
        %705 = vmatprep.subr.mxu0 0.0
        %706 = vmatpush1.msra.mxu0 0.0
        %707 = vmatprep.subr.mxu0 0.0
        %708 = vmatpush1.msra.mxu0 0.0
        %709 = vmatprep.subr.mxu0 0.0
        %710 = vmatpush1.msra.mxu0 0.0
        %711 = vmatprep.subr.mxu0 0.0
        %712 = vmatpush1.msra.mxu0 0.0
        %713 = vmatprep.subr.mxu0 0.0
        %714 = vmatpush1.msra.mxu0 0.0
        %715 = vmatprep.subr.mxu0 0.0
        %716 = vmatpush1.msra.mxu0 0.0
        %717 = vmatprep.subr.mxu0 0.0
        %718 = vmatpush1.msra.mxu0 0.0
        %719 = vmatprep.subr.mxu0 0.0
        %720 = vmatpush1.msra.mxu0 0.0
        %721 = vmatprep.subr.mxu0 0.0
        %722 = vmatpush1.msra.mxu0 0.0
        %723 = vmatprep.subr.mxu0 0.0
        %724 = vmatpush1.msra.mxu0 0.0
        %725 = vmatprep.subr.mxu0 0.0
        %726 = vmatpush1.msra.mxu0 0.0
        %727 = vmatprep.subr.mxu0 0.0
        %728 = vmatpush1.msra.mxu0 0.0
        %729 = vmatprep.subr.mxu0 0.0
        %730 = vmatpush1.msra.mxu0 0.0
        %731 = vmatprep.subr.mxu0 0.0
        %732 = vmatpush1.msra.mxu0 0.0
        %733 = vmatprep.subr.mxu0 0.0
        %734 = vmatpush1.msra.mxu0 0.0
        %735 = vmatprep.subr.mxu0 0.0
        %736 = vmatpush1.msra.mxu0 0.0
        %737 = vmatprep.subr.mxu0 0.0
        %738 = vmatpush1.msra.mxu0 0.0
        %739 = vmatprep.subr.mxu0 0.0
        %740 = vmatpush1.msra.mxu0 0.0
        %741 = vmatprep.subr.mxu0 0.0
        %742 = vmatpush1.msra.mxu0 0.0
        %743 = vmatprep.subr.mxu0 0.0
        %744 = vmatpush1.msra.mxu0 0.0
        %745 = vmatprep.subr.mxu0 0.0
        %746 = vmatpush1.msra.mxu0 0.0
        %747 = vmatprep.subr.mxu0 0.0
        %748 = vmatpush1.msra.mxu0 0.0
        %749 = vmatprep.subr.mxu0 0.0
        %750 = vmatpush1.msra.mxu0 0.0
        %751 = vmatprep.subr.mxu0 0.0
        %752 = vmatpush1.msra.mxu0 0.0
        %753 = vmatprep.subr.mxu0 0.0
        %754 = vmatpush1.msra.mxu0 0.0
        %755 = vmatprep.mubr.f32.mxu0 0.0
        %756 = vmatmul.mubr.f32.gmra.mrb[0].mxu0 %v689
        %v757 = vpop.f32.mrb[0].mxu0
        %v758 = vadd.f32 0.0, %v757
        %v759 = vpop.f32.mrb[0].mxu0
        %760 = vdwg.mxu0
        %v761 = vsel %vm222, %v758, 0.0
        %v762 = vrot.slane %v761, 4
        %v763 = vadd.f32 %v761, %v762
        %v764 = vrot.slane %v763, 2
        %v765 = vadd.f32 %v763, %v764
        %v766 = vrot.slane %v765, 1
        %v767 = vadd.f32 %v765, %v766
        %v768 = vmul.f32 %v767, %v303
        %v769 = vmul.f32 %v758, %v758
        %v770 = vsel %vm222, %v769, 0.0
        %v771 = vrot.slane %v770, 4
        %v772 = vadd.f32 %v770, %v771
        %v773 = vrot.slane %v772, 2
        %v774 = vadd.f32 %v772, %v773
        %v775 = vrot.slane %v774, 1
        %v776 = vadd.f32 %v774, %v775
        %v777 = vmul.f32 %v776, %v303
        %v778 = vmul.f32 %v768, %v768
        %v779 = vsub.f32 %v777, %v778
        %v780 = vadd.f32 %v779, 1e-05
        %v781 = vrsqrt.pop %v780
        %v782 = vmul.f32 %v216, %v781
        %v783 = vmul.f32 %v768, %v782
        %v785 = vrot.slane %v783, 7
        %v787 = vsub.f32 %v216, %v785
        %v788 = vlaneseq
        %v789 = vshrl.u32 %v788, 7
        %v790 = vsub.s32 0, %v789
        %v791 = vrot.slane %v782, %v790
        %v792 = vmul.f32 %v758, %v791
        %v793 = vlaneseq
        %v794 = vshrl.u32 %v793, 7
        %v795 = vsub.s32 1, %v794
        %v796 = vrot.slane %v787, %v795
        %v797 = vadd.f32 %v792, %v796
        %v798 = vmax.f32 %v797, 0.0
        %s799 = scalar_lea.vmem [#allocation5], 160
        %v800 = vld [vmem:[%s799] sm:$0xff]
        %v801 = vld [vmem:[%s799 + $0x8] sm:$0xff]
        %v802 = vld [vmem:[%s799 + $0x10] sm:$0xff]
        %v803 = vld [vmem:[%s799 + $0x18] sm:$0xff]
        %v804 = vlaneseq
        %v805 = vshrl.u32 %v804, 7
        %v806 = vsub.s32 2, %v805
        %v807 = vrot.slane %v216, %v806
        %v809 = vsel %vm222, %v798, 0
        %811 = vmatprep.subr.mxu0 0.0
        %812 = vmatpush1.msra.mxu0 %v800
        %813 = vmatprep.subr.mxu0 0.0
        %814 = vmatpush1.msra.mxu0 %v801
        %815 = vmatprep.subr.mxu0 0.0
        %816 = vmatpush1.msra.mxu0 %v802
        %817 = vmatprep.subr.mxu0 0.0
        %818 = vmatpush1.msra.mxu0 %v803
        %819 = vmatprep.subr.mxu0 0.0
        %820 = vmatpush1.msra.mxu0 0.0
        %821 = vmatprep.subr.mxu0 0.0
        %822 = vmatpush1.msra.mxu0 0.0
        %823 = vmatprep.subr.mxu0 0.0
        %824 = vmatpush1.msra.mxu0 0.0
        %825 = vmatprep.subr.mxu0 0.0
        %826 = vmatpush1.msra.mxu0 0.0
        %827 = vmatprep.subr.mxu0 0.0
        %828 = vmatpush1.msra.mxu0 0.0
        %829 = vmatprep.subr.mxu0 0.0
        %830 = vmatpush1.msra.mxu0 0.0
        %831 = vmatprep.subr.mxu0 0.0
        %832 = vmatpush1.msra.mxu0 0.0
        %833 = vmatprep.subr.mxu0 0.0
        %834 = vmatpush1.msra.mxu0 0.0
        %835 = vmatprep.subr.mxu0 0.0
        %836 = vmatpush1.msra.mxu0 0.0
        %837 = vmatprep.subr.mxu0 0.0
        %838 = vmatpush1.msra.mxu0 0.0
        %839 = vmatprep.subr.mxu0 0.0
        %840 = vmatpush1.msra.mxu0 0.0
        %841 = vmatprep.subr.mxu0 0.0
        %842 = vmatpush1.msra.mxu0 0.0
        %843 = vmatprep.subr.mxu0 0.0
        %844 = vmatpush1.msra.mxu0 0.0
        %845 = vmatprep.subr.mxu0 0.0
        %846 = vmatpush1.msra.mxu0 0.0
        %847 = vmatprep.subr.mxu0 0.0
        %848 = vmatpush1.msra.mxu0 0.0
        %849 = vmatprep.subr.mxu0 0.0
        %850 = vmatpush1.msra.mxu0 0.0
        %851 = vmatprep.subr.mxu0 0.0
        %852 = vmatpush1.msra.mxu0 0.0
        %853 = vmatprep.subr.mxu0 0.0
        %854 = vmatpush1.msra.mxu0 0.0
        %855 = vmatprep.subr.mxu0 0.0
        %856 = vmatpush1.msra.mxu0 0.0
        %857 = vmatprep.subr.mxu0 0.0
        %858 = vmatpush1.msra.mxu0 0.0
        %859 = vmatprep.subr.mxu0 0.0
        %860 = vmatpush1.msra.mxu0 0.0
        %861 = vmatprep.subr.mxu0 0.0
        %862 = vmatpush1.msra.mxu0 0.0
        %863 = vmatprep.subr.mxu0 0.0
        %864 = vmatpush1.msra.mxu0 0.0
        %865 = vmatprep.subr.mxu0 0.0
        %866 = vmatpush1.msra.mxu0 0.0
        %867 = vmatprep.subr.mxu0 0.0
        %868 = vmatpush1.msra.mxu0 0.0
        %869 = vmatprep.subr.mxu0 0.0
        %870 = vmatpush1.msra.mxu0 0.0
        %871 = vmatprep.subr.mxu0 0.0
        %872 = vmatpush1.msra.mxu0 0.0
        %873 = vmatprep.subr.mxu0 0.0
        %874 = vmatpush1.msra.mxu0 0.0
        %875 = vmatprep.mubr.f32.mxu0 0.0
        %876 = vmatmul.mubr.f32.gmra.mrb[0].mxu0 %v809
        %v877 = vpop.f32.mrb[0].mxu0
        %v878 = vadd.f32 %v807, %v877
        %v879 = vpop.f32.mrb[0].mxu0
        %880 = vdwg.mxu0
        %881 = vst.msk [vmem:[%s214] sm:$0xff] %vm222, %v878
        %s882 = sand.u32 %s97, 1
        %s883 = scalar_lea.sflag [#allocation4], %s882
        %s884 = sand.u32 %s97, 1
        %s885 = smul.addr %s884, 8
        %s886 = scalar_lea.vmem [#allocation8], %s885
        // Predicated region
        $region45: #{fwd.1} parent=31 // pred_check
          %p887 = pneg %p107
        $region46: #{fwd.1} parent=31 // pred_check_branch
          %889 = sbr.rel (%p887) target = $region48
        $region47: #{fwd.1} parent=31 // pred_region
          %s891 = ssub.s32 128, 128
          %892 = vsyncadd %s883, %s891
          %s893 = smul.addr %s21, 128
          %s894 = scalar_lea.hbm %s3, %s893
          %s896 = sshll.u32 %s886, 4
          %s897 = int_to_ptr.vmem [resolvable:$true] %s896
          %899 = dma.vmem_to_hbm [thread:$0]  %s897, 128, %s894, %s883
        $region48: #{fwd.1} parent=31 // pred_fallthru
          _
      $region32: #{fwd.1} parent=5 // pred_fallthru
        _
      %p900 = scmp.le.s32.totalorder 2, %s16
      // Predicated region
      $region49: #{fwd.1} parent=5 // pred_check
        %p901 = pneg %p900
      $region50: #{fwd.1} parent=5 // pred_check_branch
        %903 = sbr.rel (%p901) target = $region52
      $region51: #{fwd.1} parent=5 // pred_region
        %s904 = ssub.s32 %s16, 2
        // Predicated region
        $region53: #{fwd.1} parent=51 // pred_check
          %p905 = pneg %p113
        $region54: #{fwd.1} parent=51 // pred_check_branch
          %907 = sbr.rel (%p905) target = $region56
        $region55: #{fwd.1} parent=51 // pred_region
          %s908 = sand.u32 %s98, 1
          %s909 = scalar_lea.sflag [#allocation4], %s908
          %s910 = sand.u32 %s98, 1
          %s911 = smul.addr %s910, 8
          %s912 = scalar_lea.vmem [#allocation8], %s911
          %913 = dma.done %s909, 128
        $region56: #{fwd.1} parent=51 // pred_fallthru
          _
      $region52: #{fwd.1} parent=5 // pred_fallthru
        _
    $region6: #{fwd.1} parent=1 // loop_footer
      %s20 = sadd.s32 1, %s16
    $region7: #{fwd.1} parent=1 // loop_footer_branch
      %15 = sbr.rel target = $region3
    $region8: #{fwd.1} parent=1 // loop_exit
      _
    %914 = vsyncpa [#allocation3], 1
    %s915 = scalar_lea.sflag [#allocation3], 1
    %916 = vsyncpa %s915, 1
    %917 = vsyncpa [#allocation6], 1
    %918 = vsyncpa [#allocation4], 1
    %s919 = scalar_lea.sflag [#allocation4], 1
    %920 = vsyncpa %s919, 1

</llo_original>
